<compile_context>
chip_gen: v5e
topology: v5e:2x2
jax: 0.10.0
libtpu: 0.0.40
codegen_flags: <defaults>
</compile_context>

<pallas_src>
import jax
import jax.numpy as jnp
from jax import lax
from jax.experimental import pallas as pl
from jax.experimental.pallas import tpu as pltpu


_CHUNK = 32  # rows per register-resident scan sub-tile (16 vregs per operand)


def gaussian_noise_nn_kernel(x_ref, w1_ref, b1_ref, w2_ref, b2_ref,
                             w3_ref, b3_ref, out_ref):
    x = x_ref[...]                       # (TB, F_in)
    w1 = w1_ref[...]                     # (F_in, 64)

    # fc1 + ReLU on the VPU (contraction depth is tiny; avoid an MXU push).
    acc = b1_ref[...]                    # (1, 64) -> broadcasts to (TB, 64)
    for k in range(w1.shape[0]):         # static F_in iterations (2)
        acc = acc + x[:, k:k + 1] * w1[k:k + 1, :]
    h1 = jnp.maximum(acc, 0.0)

    # fc2 + ReLU (MXU)
    h2 = jnp.dot(h1, w2_ref[...], preferred_element_type=jnp.float32) + b2_ref[...]
    h2 = jnp.maximum(h2, 0.0)

    # fc3 (MXU). Padded lanes carry bias -1e30 so their exp() is exactly 0.
    logits = jnp.dot(h2, w3_ref[...], preferred_element_type=jnp.float32) + b3_ref[...]

    tb, n = logits.shape

    # Scan step sizes and (1, n) lane masks, built once (4 vregs per mask;
    # jnp.where broadcasts them over sublanes inside the chunk loop).
    lane = lax.broadcasted_iota(jnp.int32, (1, n), 1)
    shifts = []
    s = 1
    while s < n:                         # log2(N_pad) static steps
        shifts.append(s)
        s *= 2
    masks = [lane >= sh for sh in shifts]

    # Row-chunked softmax + inclusive lane scan + normalize + store.
    for r0 in range(0, tb, _CHUNK):      # static chunk loop
        lg = logits[r0:r0 + _CHUNK, :]                    # (CHUNK, n)

        # numerically stable exp; softmax normalization deferred until after scan
        m = jnp.max(lg, axis=-1, keepdims=True)
        c = jnp.exp(lg - m)

        # Hillis-Steele inclusive prefix sum over lanes (XLU rolls + VPU adds),
        # fully register-resident for this chunk.
        for sh, msk in zip(shifts, masks):
            rolled = pltpu.roll(c, shift=sh, axis=1)
            c = jnp.where(msk, c + rolled, c)             # same lane>=shift semantics

        # last lane of the scan is the softmax denominator -> normalize once.
        # approx reciprocal (EUP) + one Newton step to hold the 1e-4 tolerance.
        total = c[:, n - 1:n]                             # (CHUNK, 1)
        inv = pl.reciprocal(total, approx=True)
        inv = inv * (2.0 - total * inv)
        out_ref[r0:r0 + _CHUNK, :] = c * inv


def _round_up(v, m):
    return ((v + m - 1) // m) * m


def gaussian_noise_nn(x, params):
    w1, b1, w2, b2, w3, b3 = params
    b_size, f_in = x.shape
    n_hid1 = w1.shape[1]
    n_hid2 = w2.shape[1]
    n_out = w3.shape[1]

    # pad output feature dim up to a multiple of 128 lanes (500 -> 512)
    n_pad = _round_up(n_out, 128)
    pad_n = n_pad - n_out
    w3p = jnp.pad(w3.astype(jnp.float32), ((0, 0), (0, pad_n)))
    b3p = jnp.pad(b3.astype(jnp.float32), (0, pad_n), constant_values=-1e30)

    # batch tile: multiple of the 32-row scan chunk; aim for >= 2 grid steps
    # (v7x megacore) for medium batches; 512-row tiles for large batches.
    if b_size >= 1024:
        tb = 512
    else:
        tb = max(_CHUNK, _round_up(max(b_size // 2, 1), _CHUNK))
    b_pad = _round_up(b_size, tb)
    x_p = jnp.pad(x.astype(jnp.float32), ((0, b_pad - b_size), (0, 0)))

    cost = pl.CostEstimate(
        flops=2 * b_pad * (f_in * n_hid1 + n_hid1 * n_hid2 + n_hid2 * n_pad),
        transcendentals=b_pad * n_pad,
        bytes_accessed=4 * (b_pad * (f_in + n_pad)
                            + f_in * n_hid1 + n_hid1 * n_hid2 + n_hid2 * n_pad),
    )

    out = pl.pallas_call(
        gaussian_noise_nn_kernel,
        out_shape=jax.ShapeDtypeStruct((b_pad, n_pad), jnp.float32),
        grid=(b_pad // tb,),
        in_specs=[
            pl.BlockSpec((tb, f_in), lambda i: (i, 0)),        # x (batch tiled)
            pl.BlockSpec((f_in, n_hid1), lambda i: (0, 0)),    # w1 (resident)
            pl.BlockSpec((1, n_hid1), lambda i: (0, 0)),       # b1
            pl.BlockSpec((n_hid1, n_hid2), lambda i: (0, 0)),  # w2
            pl.BlockSpec((1, n_hid2), lambda i: (0, 0)),       # b2
            pl.BlockSpec((n_hid2, n_pad), lambda i: (0, 0)),   # w3 (padded)
            pl.BlockSpec((1, n_pad), lambda i: (0, 0)),        # b3 (padded)
        ],
        out_specs=pl.BlockSpec((tb, n_pad), lambda i: (i, 0)),
        compiler_params=pltpu.CompilerParams(
            dimension_semantics=("parallel",)),
        cost_estimate=cost,
    )(x_p,
      w1.astype(jnp.float32), b1.reshape(1, -1).astype(jnp.float32),
      w2.astype(jnp.float32), b2.reshape(1, -1).astype(jnp.float32),
      w3p, b3p.reshape(1, -1))
    return out[:b_size, :n_out]


def init_params(key, input_size=2, output_n_timesteps=500):
    """Deterministic init mimicking nn.Linear defaults (uniform +-1/sqrt(fan_in))."""
    dims = [(input_size, 64), (64, 128), (128, output_n_timesteps)]
    params = []
    for fan_in, fan_out in dims:
        key, kw, kb = jax.random.split(key, 3)
        bound = 1.0 / jnp.sqrt(jnp.float32(fan_in))
        w = jax.random.uniform(kw, (fan_in, fan_out), jnp.float32, -bound, bound)
        b = jax.random.uniform(kb, (fan_out,), jnp.float32, -bound, bound)
        params.extend([w, b])
    return tuple(params)


def reference_forward(x, params):
    w1, b1, w2, b2, w3, b3 = params
    h1 = jax.nn.relu(x @ w1 + b1)
    h2 = jax.nn.relu(h1 @ w2 + b2)
    p = jax.nn.softmax(h2 @ w3 + b3, axis=1)
    return jnp.cumsum(p, axis=1)


if __name__ == "__main__":
    key = jax.random.PRNGKey(0)
    key, kx = jax.random.split(key)

    batch, input_size, output_n_timesteps = 8, 2, 500
    x = jax.random.normal(kx, (batch, input_size), dtype=jnp.float32)
    params = init_params(key, input_size, output_n_timesteps)

    out = gaussian_noise_nn(x, params)
    out = jax.block_until_ready(out)

    ref = reference_forward(x, params)
    assert out.shape == (batch, output_n_timesteps)
    assert jnp.allclose(out, ref, atol=1e-4, rtol=1e-4), "mismatch vs JAX reference"
    # cumsum of a softmax must end at ~1.0
    assert jnp.allclose(out[:, -1], 1.0, atol=1e-4)

    print("KERNEL_OK")
</pallas_src>

<mosaic_0001>
module attributes {stable_mosaic.version = 11 : i64} {
  func.func @gaussian_noise_nn_kernel(%arg0: i32, %arg1: memref<32x2xf32, #tpu.memory_space<vmem>>, %arg2: memref<2x64xf32, #tpu.memory_space<vmem>>, %arg3: memref<1x64xf32, #tpu.memory_space<vmem>>, %arg4: memref<64x128xf32, #tpu.memory_space<vmem>>, %arg5: memref<1x128xf32, #tpu.memory_space<vmem>>, %arg6: memref<128x512xf32, #tpu.memory_space<vmem>>, %arg7: memref<1x512xf32, #tpu.memory_space<vmem>>, %arg8: memref<32x512xf32, #tpu.memory_space<vmem>>) attributes {dimension_semantics = [#tpu.dimension_semantics<parallel>], iteration_bounds = array<i64: 1>, scalar_prefetch = 0 : i64, scratch_operands = 0 : i64, tpu.core_type = #tpu.core_type<tc>, window_params = [{transform_indices = @transform_0, window_bounds = array<i64: 32, 2>}, {pipeline_mode = #tpu.pipeline_mode<synchronous>, transform_indices = @transform_1, window_bounds = array<i64: 2, 64>}, {pipeline_mode = #tpu.pipeline_mode<synchronous>, transform_indices = @transform_2, window_bounds = array<i64: 1, 64>}, {pipeline_mode = #tpu.pipeline_mode<synchronous>, transform_indices = @transform_3, window_bounds = array<i64: 64, 128>}, {pipeline_mode = #tpu.pipeline_mode<synchronous>, transform_indices = @transform_4, window_bounds = array<i64: 1, 128>}, {pipeline_mode = #tpu.pipeline_mode<synchronous>, transform_indices = @transform_5, window_bounds = array<i64: 128, 512>}, {pipeline_mode = #tpu.pipeline_mode<synchronous>, transform_indices = @transform_6, window_bounds = array<i64: 1, 512>}, {transform_indices = @transform_7, window_bounds = array<i64: 32, 512>}]} {
    %c0 = arith.constant 0 : index
    %c0_0 = arith.constant 0 : index
    %0 = vector.load %arg1[%c0, %c0_0] : memref<32x2xf32, #tpu.memory_space<vmem>>, vector<32x2xf32>
    %c0_1 = arith.constant 0 : index
    %c0_2 = arith.constant 0 : index
    %1 = vector.load %arg2[%c0_1, %c0_2] : memref<2x64xf32, #tpu.memory_space<vmem>>, vector<2x64xf32>
    %c0_3 = arith.constant 0 : index
    %c0_4 = arith.constant 0 : index
    %2 = vector.load %arg3[%c0_3, %c0_4] : memref<1x64xf32, #tpu.memory_space<vmem>>, vector<1x64xf32>
    %3 = vector.extract_strided_slice %0 {offsets = [0, 0], sizes = [32, 1], strides = [1, 1]} : vector<32x2xf32> to vector<32x1xf32>
    %4 = vector.extract_strided_slice %1 {offsets = [0, 0], sizes = [1, 64], strides = [1, 1]} : vector<2x64xf32> to vector<1x64xf32>
    %5 = vector.broadcast %3 : vector<32x1xf32> to vector<32x64xf32>
    %6 = vector.broadcast %4 : vector<1x64xf32> to vector<32x64xf32>
    %7 = arith.mulf %5, %6 : vector<32x64xf32>
    %8 = vector.broadcast %2 : vector<1x64xf32> to vector<32x64xf32>
    %9 = arith.addf %8, %7 : vector<32x64xf32>
    %10 = vector.extract_strided_slice %0 {offsets = [0, 1], sizes = [32, 1], strides = [1, 1]} : vector<32x2xf32> to vector<32x1xf32>
    %11 = vector.extract_strided_slice %1 {offsets = [1, 0], sizes = [1, 64], strides = [1, 1]} : vector<2x64xf32> to vector<1x64xf32>
    %12 = vector.broadcast %10 : vector<32x1xf32> to vector<32x64xf32>
    %13 = vector.broadcast %11 : vector<1x64xf32> to vector<32x64xf32>
    %14 = arith.mulf %12, %13 : vector<32x64xf32>
    %15 = arith.addf %9, %14 : vector<32x64xf32>
    %cst = arith.constant 0.000000e+00 : f32
    %16 = vector.broadcast %cst : f32 to vector<32x64xf32>
    %17 = arith.maximumf %15, %16 : vector<32x64xf32>
    %c0_5 = arith.constant 0 : index
    %c0_6 = arith.constant 0 : index
    %18 = vector.load %arg4[%c0_5, %c0_6] : memref<64x128xf32, #tpu.memory_space<vmem>>, vector<64x128xf32>
    %cst_7 = arith.constant dense<0.000000e+00> : vector<32x128xf32>
    %19 = tpu.matmul %17, %18, %cst_7 {dimension_numbers = #tpu.dot_dimension_numbers<[1], [0], [0], [1], [0, 0, 1, 1], [], []>} : vector<32x64xf32>, vector<64x128xf32>, vector<32x128xf32> -> vector<32x128xf32>
    %c0_8 = arith.constant 0 : index
    %c0_9 = arith.constant 0 : index
    %20 = vector.load %arg5[%c0_8, %c0_9] : memref<1x128xf32, #tpu.memory_space<vmem>>, vector<1x128xf32>
    %21 = vector.broadcast %20 : vector<1x128xf32> to vector<32x128xf32>
    %22 = arith.addf %19, %21 : vector<32x128xf32>
    %cst_10 = arith.constant 0.000000e+00 : f32
    %23 = vector.broadcast %cst_10 : f32 to vector<32x128xf32>
    %24 = arith.maximumf %22, %23 : vector<32x128xf32>
    %c0_11 = arith.constant 0 : index
    %c0_12 = arith.constant 0 : index
    %25 = vector.load %arg6[%c0_11, %c0_12] : memref<128x512xf32, #tpu.memory_space<vmem>>, vector<128x512xf32>
    %cst_13 = arith.constant dense<0.000000e+00> : vector<32x512xf32>
    %26 = tpu.matmul %24, %25, %cst_13 {dimension_numbers = #tpu.dot_dimension_numbers<[1], [0], [0], [1], [0, 0, 1, 1], [], []>} : vector<32x128xf32>, vector<128x512xf32>, vector<32x512xf32> -> vector<32x512xf32>
    %c0_14 = arith.constant 0 : index
    %c0_15 = arith.constant 0 : index
    %27 = vector.load %arg7[%c0_14, %c0_15] : memref<1x512xf32, #tpu.memory_space<vmem>>, vector<1x512xf32>
    %28 = vector.broadcast %27 : vector<1x512xf32> to vector<32x512xf32>
    %29 = arith.addf %26, %28 : vector<32x512xf32>
    %30 = tpu.iota {dimensions = array<i32: 1>} : vector<1x512xi32>
    %c1_i32 = arith.constant 1 : i32
    %31 = vector.broadcast %c1_i32 : i32 to vector<1x512xi32>
    %32 = arith.cmpi sge, %30, %31 : vector<1x512xi32>
    %c2_i32 = arith.constant 2 : i32
    %33 = vector.broadcast %c2_i32 : i32 to vector<1x512xi32>
    %34 = arith.cmpi sge, %30, %33 : vector<1x512xi32>
    %c4_i32 = arith.constant 4 : i32
    %35 = vector.broadcast %c4_i32 : i32 to vector<1x512xi32>
    %36 = arith.cmpi sge, %30, %35 : vector<1x512xi32>
    %c8_i32 = arith.constant 8 : i32
    %37 = vector.broadcast %c8_i32 : i32 to vector<1x512xi32>
    %38 = arith.cmpi sge, %30, %37 : vector<1x512xi32>
    %c16_i32 = arith.constant 16 : i32
    %39 = vector.broadcast %c16_i32 : i32 to vector<1x512xi32>
    %40 = arith.cmpi sge, %30, %39 : vector<1x512xi32>
    %c32_i32 = arith.constant 32 : i32
    %41 = vector.broadcast %c32_i32 : i32 to vector<1x512xi32>
    %42 = arith.cmpi sge, %30, %41 : vector<1x512xi32>
    %c64_i32 = arith.constant 64 : i32
    %43 = vector.broadcast %c64_i32 : i32 to vector<1x512xi32>
    %44 = arith.cmpi sge, %30, %43 : vector<1x512xi32>
    %c128_i32 = arith.constant 128 : i32
    %45 = vector.broadcast %c128_i32 : i32 to vector<1x512xi32>
    %46 = arith.cmpi sge, %30, %45 : vector<1x512xi32>
    %c256_i32 = arith.constant 256 : i32
    %47 = vector.broadcast %c256_i32 : i32 to vector<1x512xi32>
    %48 = arith.cmpi sge, %30, %47 : vector<1x512xi32>
    %cst_16 = arith.constant dense<0xFF800000> : vector<32xf32>
    %49 = vector.multi_reduction <maximumf>, %29, %cst_16 [1] : vector<32x512xf32> to vector<32xf32>
    %50 = vector.shape_cast %49 : vector<32xf32> to vector<32x1xf32>
    %51 = vector.broadcast %50 : vector<32x1xf32> to vector<32x512xf32>
    %52 = arith.subf %29, %51 : vector<32x512xf32>
    %53 = math.exp %52 : vector<32x512xf32>
    %c1_i32_17 = arith.constant 1 : i32
    %54 = tpu.dynamic_rotate %53 by %c1_i32_17 dim 1 : vector<32x512xf32>, i32 -> vector<32x512xf32>
    %55 = arith.addf %53, %54 : vector<32x512xf32>
    %56 = vector.shape_cast %32 : vector<1x512xi1> to vector<1x512xi1>
    %57 = vector.broadcast %56 : vector<1x512xi1> to vector<32x512xi1>
    %58 = arith.select %57, %55, %53 : vector<32x512xi1>, vector<32x512xf32>
    %c2_i32_18 = arith.constant 2 : i32
    %59 = tpu.dynamic_rotate %58 by %c2_i32_18 dim 1 : vector<32x512xf32>, i32 -> vector<32x512xf32>
    %60 = arith.addf %58, %59 : vector<32x512xf32>
    %61 = vector.shape_cast %34 : vector<1x512xi1> to vector<1x512xi1>
    %62 = vector.broadcast %61 : vector<1x512xi1> to vector<32x512xi1>
    %63 = arith.select %62, %60, %58 : vector<32x512xi1>, vector<32x512xf32>
    %c4_i32_19 = arith.constant 4 : i32
    %64 = tpu.dynamic_rotate %63 by %c4_i32_19 dim 1 : vector<32x512xf32>, i32 -> vector<32x512xf32>
    %65 = arith.addf %63, %64 : vector<32x512xf32>
    %66 = vector.shape_cast %36 : vector<1x512xi1> to vector<1x512xi1>
    %67 = vector.broadcast %66 : vector<1x512xi1> to vector<32x512xi1>
    %68 = arith.select %67, %65, %63 : vector<32x512xi1>, vector<32x512xf32>
    %c8_i32_20 = arith.constant 8 : i32
    %69 = tpu.dynamic_rotate %68 by %c8_i32_20 dim 1 : vector<32x512xf32>, i32 -> vector<32x512xf32>
    %70 = arith.addf %68, %69 : vector<32x512xf32>
    %71 = vector.shape_cast %38 : vector<1x512xi1> to vector<1x512xi1>
    %72 = vector.broadcast %71 : vector<1x512xi1> to vector<32x512xi1>
    %73 = arith.select %72, %70, %68 : vector<32x512xi1>, vector<32x512xf32>
    %c16_i32_21 = arith.constant 16 : i32
    %74 = tpu.dynamic_rotate %73 by %c16_i32_21 dim 1 : vector<32x512xf32>, i32 -> vector<32x512xf32>
    %75 = arith.addf %73, %74 : vector<32x512xf32>
    %76 = vector.shape_cast %40 : vector<1x512xi1> to vector<1x512xi1>
    %77 = vector.broadcast %76 : vector<1x512xi1> to vector<32x512xi1>
    %78 = arith.select %77, %75, %73 : vector<32x512xi1>, vector<32x512xf32>
    %c32_i32_22 = arith.constant 32 : i32
    %79 = tpu.dynamic_rotate %78 by %c32_i32_22 dim 1 : vector<32x512xf32>, i32 -> vector<32x512xf32>
    %80 = arith.addf %78, %79 : vector<32x512xf32>
    %81 = vector.shape_cast %42 : vector<1x512xi1> to vector<1x512xi1>
    %82 = vector.broadcast %81 : vector<1x512xi1> to vector<32x512xi1>
    %83 = arith.select %82, %80, %78 : vector<32x512xi1>, vector<32x512xf32>
    %c64_i32_23 = arith.constant 64 : i32
    %84 = tpu.dynamic_rotate %83 by %c64_i32_23 dim 1 : vector<32x512xf32>, i32 -> vector<32x512xf32>
    %85 = arith.addf %83, %84 : vector<32x512xf32>
    %86 = vector.shape_cast %44 : vector<1x512xi1> to vector<1x512xi1>
    %87 = vector.broadcast %86 : vector<1x512xi1> to vector<32x512xi1>
    %88 = arith.select %87, %85, %83 : vector<32x512xi1>, vector<32x512xf32>
    %c128_i32_24 = arith.constant 128 : i32
    %89 = tpu.dynamic_rotate %88 by %c128_i32_24 dim 1 : vector<32x512xf32>, i32 -> vector<32x512xf32>
    %90 = arith.addf %88, %89 : vector<32x512xf32>
    %91 = vector.shape_cast %46 : vector<1x512xi1> to vector<1x512xi1>
    %92 = vector.broadcast %91 : vector<1x512xi1> to vector<32x512xi1>
    %93 = arith.select %92, %90, %88 : vector<32x512xi1>, vector<32x512xf32>
    %c256_i32_25 = arith.constant 256 : i32
    %94 = tpu.dynamic_rotate %93 by %c256_i32_25 dim 1 : vector<32x512xf32>, i32 -> vector<32x512xf32>
    %95 = arith.addf %93, %94 : vector<32x512xf32>
    %96 = vector.shape_cast %48 : vector<1x512xi1> to vector<1x512xi1>
    %97 = vector.broadcast %96 : vector<1x512xi1> to vector<32x512xi1>
    %98 = arith.select %97, %95, %93 : vector<32x512xi1>, vector<32x512xf32>
    %99 = vector.extract_strided_slice %98 {offsets = [0, 511], sizes = [32, 1], strides = [1, 1]} : vector<32x512xf32> to vector<32x1xf32>
    %100 = tpu.reciprocal %99 {approx = true} : vector<32x1xf32> -> vector<32x1xf32>
    %101 = arith.mulf %99, %100 : vector<32x1xf32>
    %cst_26 = arith.constant 2.000000e+00 : f32
    %102 = vector.broadcast %cst_26 : f32 to vector<32x1xf32>
    %103 = arith.subf %102, %101 : vector<32x1xf32>
    %104 = arith.mulf %100, %103 : vector<32x1xf32>
    %105 = vector.broadcast %104 : vector<32x1xf32> to vector<32x512xf32>
    %106 = arith.mulf %98, %105 : vector<32x512xf32>
    %c0_27 = arith.constant 0 : index
    %c0_28 = arith.constant 0 : index
    %107 = vector.load %arg8[%c0_27, %c0_28] : memref<32x512xf32, #tpu.memory_space<vmem>>, vector<32x512xf32>
    tpu.vector_store %arg8[%c0_27, %c0_28], %106 {strides = array<i32>} : memref<32x512xf32, #tpu.memory_space<vmem>>, vector<32x512xf32>,
    return
  }
  func.func @transform_0(%arg0: i32) -> (i32, i32) {
    %c0_i32 = arith.constant 0 : i32
    %c0_i32_0 = arith.constant 0 : i32
    return %arg0, %c0_i32 : i32, i32
  }
  func.func @transform_1(%arg0: i32) -> (i32, i32) {
    %c0_i32 = arith.constant 0 : i32
    %c0_i32_0 = arith.constant 0 : i32
    %c0_i32_1 = arith.constant 0 : i32
    return %c0_i32, %c0_i32_0 : i32, i32
  }
  func.func @transform_2(%arg0: i32) -> (i32, i32) {
    %c0_i32 = arith.constant 0 : i32
    %c0_i32_0 = arith.constant 0 : i32
    %c0_i32_1 = arith.constant 0 : i32
    return %c0_i32, %c0_i32_0 : i32, i32
  }
  func.func @transform_3(%arg0: i32) -> (i32, i32) {
    %c0_i32 = arith.constant 0 : i32
    %c0_i32_0 = arith.constant 0 : i32
    %c0_i32_1 = arith.constant 0 : i32
    return %c0_i32, %c0_i32_0 : i32, i32
  }
  func.func @transform_4(%arg0: i32) -> (i32, i32) {
    %c0_i32 = arith.constant 0 : i32
    %c0_i32_0 = arith.constant 0 : i32
    %c0_i32_1 = arith.constant 0 : i32
    return %c0_i32, %c0_i32_0 : i32, i32
  }
  func.func @transform_5(%arg0: i32) -> (i32, i32) {
    %c0_i32 = arith.constant 0 : i32
    %c0_i32_0 = arith.constant 0 : i32
    %c0_i32_1 = arith.constant 0 : i32
    return %c0_i32, %c0_i32_0 : i32, i32
  }
  func.func @transform_6(%arg0: i32) -> (i32, i32) {
    %c0_i32 = arith.constant 0 : i32
    %c0_i32_0 = arith.constant 0 : i32
    %c0_i32_1 = arith.constant 0 : i32
    return %c0_i32, %c0_i32_0 : i32, i32
  }
  func.func @transform_7(%arg0: i32) -> (i32, i32) {
    %c0_i32 = arith.constant 0 : i32
    %c0_i32_0 = arith.constant 0 : i32
    return %arg0, %c0_i32 : i32, i32
  }
}

</mosaic_0001>

<llo_original>
// kernel: tpu_custom_call.1
$region0: #{tpu_custom_call.1}
  #allocation0 [shape = 'u32[]', space=smem, size = 0x4, offset = 0x4, fixed_abs, tag = 'smem constant byte address 0x4 - core index']
  #allocation1 [shape = 'u32[72,128]{1,0:T(1,128)}', space=vmem, size = 0x9000, scoped, tag = 'internal scratch']
  %s0 = inlined_call_operand.vmem [shape: f32[32,2], index: 0, kind: input, shape index: {}]
  %s1 = inlined_call_operand.vmem [shape: f32[2,64], index: 1, kind: input, shape index: {}]
  %s2 = inlined_call_operand.vmem [shape: f32[1,64], index: 2, kind: input, shape index: {}]
  %s3 = inlined_call_operand.hbm [shape: f32[64,128], index: 3, kind: input, shape index: {}]
  %s4 = inlined_call_operand.vmem [shape: f32[1,128], index: 4, kind: input, shape index: {}]
  %s5 = inlined_call_operand.hbm [shape: f32[128,512], index: 5, kind: input, shape index: {}]
  %s6 = inlined_call_operand.vmem [shape: f32[1,512], index: 6, kind: input, shape index: {}]
  %s7 = inlined_call_operand.hbm [shape: f32[32,512], index: 7, kind: output, shape index: {}]
  %s8 = sld [smem:[#allocation0]]
  $region46: #{tpu_custom_call.1} parent=0
    _
  %s10 = ssub.s32 1, %s8
  %s11 = scalar_select 0, %s10, %s8
  $region1: #{tpu_custom_call.1} parent=0
    #allocation2 [shape = 'u8[32768]{0}', space=vmem, size = 0x8000, scoped, tag = 'input window, operand 3, single buffered']
    #allocation3 [shape = 's32[1]{0}', space=sflag, size = 0x4, scoped, tag = 'scoped memory for tpu_custom_call.1']
    #allocation4 [shape = 's32[1]{0}', space=sflag, size = 0x4, scoped, tag = 'scoped memory for tpu_custom_call.1']
    #allocation5 [shape = 'u8[262144]{0}', space=vmem, size = 0x40000, scoped, tag = 'input window, operand 5, single buffered']
    #allocation6 [shape = 's32[1]{0}', space=sflag, size = 0x4, scoped, tag = 'scoped memory for tpu_custom_call.1']
    #allocation7 [shape = 'u8[65536]{0}', space=vmem, size = 0x10000, scoped, tag = 'output window, operand 0, single buffered']
    %12 = vsyncpa [#allocation3], 0
    %13 = vsyncpa [#allocation6], 0
    %14 = vsyncpa [#allocation4], 0
    // Predicated region
    $region2: #{tpu_custom_call.1} parent=1 // pred_check
      _
    $region3: #{tpu_custom_call.1} parent=1 // pred_check_branch
      %16 = sbr.rel (0) target = $region5
    $region4: #{tpu_custom_call.1} parent=1 // pred_region
      _
    $region5: #{tpu_custom_call.1} parent=1 // pred_fallthru
      _
    // Predicated region
    $region6: #{tpu_custom_call.1} parent=1 // pred_check
      _
    $region7: #{tpu_custom_call.1} parent=1 // pred_check_branch
      %18 = sbr.rel (0) target = $region9
    $region8: #{tpu_custom_call.1} parent=1 // pred_region
      _
    $region9: #{tpu_custom_call.1} parent=1 // pred_fallthru
      _
    // Predicated region
    $region10: #{tpu_custom_call.1} parent=1 // pred_check
      _
    $region11: #{tpu_custom_call.1} parent=1 // pred_check_branch
      %20 = sbr.rel (0) target = $region13
    $region12: #{tpu_custom_call.1} parent=1 // pred_region
      _
    $region13: #{tpu_custom_call.1} parent=1 // pred_fallthru
      _
    // Predicated region
    $region14: #{tpu_custom_call.1} parent=1 // pred_check
      _
    $region15: #{tpu_custom_call.1} parent=1 // pred_check_branch
      %22 = sbr.rel (0) target = $region17
    $region16: #{tpu_custom_call.1} parent=1 // pred_region
      %24 = vsyncadd [#allocation3], 0
      %s25 = sshll.u32 %s3, 4
      %s26 = int_to_ptr.hbm [resolvable:$true] %s25
      %s27 = sshll.u32 [#allocation2], 4
      %s28 = int_to_ptr.vmem [resolvable:$true] %s27
      %33 = dma.hbm_to_vmem [thread:$0]  %s26, 1024, %s28, [#allocation3], 128, 128, 8
    $region17: #{tpu_custom_call.1} parent=1 // pred_fallthru
      _
    // Predicated region
    $region18: #{tpu_custom_call.1} parent=1 // pred_check
      _
    $region19: #{tpu_custom_call.1} parent=1 // pred_check_branch
      %35 = sbr.rel (0) target = $region21
    $region20: #{tpu_custom_call.1} parent=1 // pred_region
      _
    $region21: #{tpu_custom_call.1} parent=1 // pred_fallthru
      _
    // Predicated region
    $region22: #{tpu_custom_call.1} parent=1 // pred_check
      _
    $region23: #{tpu_custom_call.1} parent=1 // pred_check_branch
      %37 = sbr.rel (0) target = $region25
    $region24: #{tpu_custom_call.1} parent=1 // pred_region
      %39 = vsyncadd [#allocation6], 0
      %s40 = sshll.u32 %s5, 4
      %s41 = int_to_ptr.hbm [resolvable:$true] %s40
      %s42 = sshll.u32 [#allocation5], 4
      %s43 = int_to_ptr.vmem [resolvable:$true] %s42
      %48 = dma.hbm_to_vmem [thread:$0]  %s41, 8192, %s43, [#allocation6], 512, 512, 32
    $region25: #{tpu_custom_call.1} parent=1 // pred_fallthru
      _
    // Predicated region
    $region26: #{tpu_custom_call.1} parent=1 // pred_check
      _
    $region27: #{tpu_custom_call.1} parent=1 // pred_check_branch
      %50 = sbr.rel (0) target = $region29
    $region28: #{tpu_custom_call.1} parent=1 // pred_region
      _
    $region29: #{tpu_custom_call.1} parent=1 // pred_fallthru
      _
    // Predicated region
    $region30: #{tpu_custom_call.1} parent=1 // pred_check
      _
    $region31: #{tpu_custom_call.1} parent=1 // pred_check_branch
      %52 = sbr.rel (0) target = $region33
    $region32: #{tpu_custom_call.1} parent=1 // pred_region
      %54 = dma.done [#allocation3], 1024
    $region33: #{tpu_custom_call.1} parent=1 // pred_fallthru
      _
    // Predicated region
    $region34: #{tpu_custom_call.1} parent=1 // pred_check
      _
    $region35: #{tpu_custom_call.1} parent=1 // pred_check_branch
      %56 = sbr.rel (0) target = $region37
    $region36: #{tpu_custom_call.1} parent=1 // pred_region
      %58 = dma.done [#allocation6], 8192
    $region37: #{tpu_custom_call.1} parent=1 // pred_fallthru
      _
    %v59 = vld [vmem:[%s0] sm:$0xff]
    %v60 = vld [vmem:[%s0 + $0x8] sm:$0xff]
    %v61 = vld [vmem:[%s0 + $0x10] sm:$0xff]
    %v62 = vld [vmem:[%s0 + $0x18] sm:$0xff]
    %v63 = vld [vmem:[%s1] sm:$0x3]
    %v64 = vld [vmem:[%s2] sm:$0x1]
    %66 = vset.pattern.permute.xlu0 0
    %67 = vperm.xlu0 %66, %v59
    %v68 = vpop.permute.xlu0 %67
    %71 = vset.pattern.permute.xlu0 0
    %72 = vperm.xlu0 %71, %v60
    %v73 = vpop.permute.xlu0 %72
    %76 = vset.pattern.permute.xlu0 0
    %77 = vperm.xlu0 %76, %v61
    %v78 = vpop.permute.xlu0 %77
    %81 = vset.pattern.permute.xlu0 0
    %82 = vperm.xlu0 %81, %v62
    %v83 = vpop.permute.xlu0 %82
    %v85 = vperm.slane %v63, 0
    %v86 = vmul.f32 %v68, %v85
    %v87 = vmul.f32 %v73, %v85
    %v88 = vmul.f32 %v78, %v85
    %v89 = vmul.f32 %v83, %v85
    %v91 = vperm.slane %v64, 0
    %v93 = vadd.f32 %v91, %v86
    %v94 = vadd.f32 %v91, %v87
    %v95 = vadd.f32 %v91, %v88
    %v96 = vadd.f32 %v91, %v89
    %97 = vset.pattern.permute.xlu0 1
    %98 = vperm.xlu0 %97, %v59
    %v99 = vpop.permute.xlu0 %98
    %101 = vset.pattern.permute.xlu0 1
    %102 = vperm.xlu0 %101, %v60
    %v103 = vpop.permute.xlu0 %102
    %105 = vset.pattern.permute.xlu0 1
    %106 = vperm.xlu0 %105, %v61
    %v107 = vpop.permute.xlu0 %106
    %109 = vset.pattern.permute.xlu0 1
    %110 = vperm.xlu0 %109, %v62
    %v111 = vpop.permute.xlu0 %110
    %v113 = vperm.slane %v63, 1
    %v114 = vmul.f32 %v99, %v113
    %v115 = vmul.f32 %v103, %v113
    %v116 = vmul.f32 %v107, %v113
    %v117 = vmul.f32 %v111, %v113
    %v118 = vadd.f32 %v93, %v114
    %v119 = vadd.f32 %v94, %v115
    %v120 = vadd.f32 %v95, %v116
    %v121 = vadd.f32 %v96, %v117
    %v122 = vmax.f32 %v118, 0.0
    %v123 = vmax.f32 %v119, 0.0
    %v124 = vmax.f32 %v120, 0.0
    %v125 = vmax.f32 %v121, 0.0
    %v126 = vld [vmem:[#allocation2] sm:$0xff]
    %v127 = vld [vmem:[#allocation2 + $0x8] sm:$0xff]
    %v128 = vld [vmem:[#allocation2 + $0x10] sm:$0xff]
    %v129 = vld [vmem:[#allocation2 + $0x18] sm:$0xff]
    %v130 = vld [vmem:[#allocation2 + $0x20] sm:$0xff]
    %v131 = vld [vmem:[#allocation2 + $0x28] sm:$0xff]
    %v132 = vld [vmem:[#allocation2 + $0x30] sm:$0xff]
    %v133 = vld [vmem:[#allocation2 + $0x38] sm:$0xff]
    %v134 = vld [vmem:[%s4] sm:$0x1]
    %v136 = vperm.slane %v134, 0
    %vm138 = vcmask 523264
    %v140 = vsel %vm138, %v122, 0
    %v143 = vsel %vm138, %v123, 0
    %v146 = vsel %vm138, %v124, 0
    %v149 = vsel %vm138, %v125, 0
    %151 = vmatpush.msra.mxu0 0.0
    %152 = vmatpush.msra.mxu0 0.0
    %153 = vmatpush.msra.mxu0 0.0
    %154 = vmatpush.msra.mxu0 0.0
    %155 = vmatpush.msra.mxu0 0.0
    %156 = vmatpush.msra.mxu0 0.0
    %157 = vmatpush.msra.mxu0 0.0
    %158 = vmatpush.msra.mxu0 0.0
    %159 = vmatpush.msra.mxu0 %v133
    %160 = vmatpush.msra.mxu0 %v132
    %161 = vmatpush.msra.mxu0 %v131
    %162 = vmatpush.msra.mxu0 %v130
    %163 = vmatpush.msra.mxu0 %v129
    %164 = vmatpush.msra.mxu0 %v128
    %165 = vmatpush.msra.mxu0 %v127
    %166 = vmatpush.msra.mxu0 %v126
    %167 = vmatmul.f32.gmra.mxu0 %v140
    %v168 = vpop.f32.mrf.mxu0
    %v169 = vadd.f32 %v136, %v168
    %170 = vmatmul.f32.gmra.mxu0 %v143
    %v171 = vpop.f32.mrf.mxu0
    %v172 = vadd.f32 %v136, %v171
    %173 = vmatmul.f32.gmra.mxu0 %v146
    %v174 = vpop.f32.mrf.mxu0
    %v175 = vadd.f32 %v136, %v174
    %176 = vmatmul.f32.gmra.mxu0 %v149
    %v177 = vpop.f32.mrf.mxu0
    %v178 = vadd.f32 %v136, %v177
    %179 = vdwg.mxu0
    %v180 = vmax.f32 %v169, 0.0
    %v181 = vmax.f32 %v172, 0.0
    %v182 = vmax.f32 %v175, 0.0
    %v183 = vmax.f32 %v178, 0.0
    %v184 = vld [vmem:[#allocation5] sm:$0xff]
    %v185 = vld [vmem:[#allocation5 + $0x8] sm:$0xff]
    %v186 = vld [vmem:[#allocation5 + $0x10] sm:$0xff]
    %v187 = vld [vmem:[#allocation5 + $0x18] sm:$0xff]
    %v188 = vld [vmem:[#allocation5 + $0x20] sm:$0xff]
    %v189 = vld [vmem:[#allocation5 + $0x28] sm:$0xff]
    %v190 = vld [vmem:[#allocation5 + $0x30] sm:$0xff]
    %v191 = vld [vmem:[#allocation5 + $0x38] sm:$0xff]
    %v192 = vld [vmem:[#allocation5 + $0x40] sm:$0xff]
    %v193 = vld [vmem:[#allocation5 + $0x48] sm:$0xff]
    %v194 = vld [vmem:[#allocation5 + $0x50] sm:$0xff]
    %v195 = vld [vmem:[#allocation5 + $0x58] sm:$0xff]
    %v196 = vld [vmem:[#allocation5 + $0x60] sm:$0xff]
    %v197 = vld [vmem:[#allocation5 + $0x68] sm:$0xff]
    %v198 = vld [vmem:[#allocation5 + $0x70] sm:$0xff]
    %v199 = vld [vmem:[#allocation5 + $0x78] sm:$0xff]
    %v200 = vld [vmem:[#allocation5 + $0x80] sm:$0xff]
    %v201 = vld [vmem:[#allocation5 + $0x88] sm:$0xff]
    %v202 = vld [vmem:[#allocation5 + $0x90] sm:$0xff]
    %v203 = vld [vmem:[#allocation5 + $0x98] sm:$0xff]
    %v204 = vld [vmem:[#allocation5 + $0xa0] sm:$0xff]
    %v205 = vld [vmem:[#allocation5 + $0xa8] sm:$0xff]
    %v206 = vld [vmem:[#allocation5 + $0xb0] sm:$0xff]
    %v207 = vld [vmem:[#allocation5 + $0xb8] sm:$0xff]
    %v208 = vld [vmem:[#allocation5 + $0xc0] sm:$0xff]
    %v209 = vld [vmem:[#allocation5 + $0xc8] sm:$0xff]
    %v210 = vld [vmem:[#allocation5 + $0xd0] sm:$0xff]
    %v211 = vld [vmem:[#allocation5 + $0xd8] sm:$0xff]
    %v212 = vld [vmem:[#allocation5 + $0xe0] sm:$0xff]
    %v213 = vld [vmem:[#allocation5 + $0xe8] sm:$0xff]
    %v214 = vld [vmem:[#allocation5 + $0xf0] sm:$0xff]
    %v215 = vld [vmem:[#allocation5 + $0xf8] sm:$0xff]
    %v216 = vld [vmem:[#allocation5 + $0x100] sm:$0xff]
    %v217 = vld [vmem:[#allocation5 + $0x108] sm:$0xff]
    %v218 = vld [vmem:[#allocation5 + $0x110] sm:$0xff]
    %v219 = vld [vmem:[#allocation5 + $0x118] sm:$0xff]
    %v220 = vld [vmem:[#allocation5 + $0x120] sm:$0xff]
    %v221 = vld [vmem:[#allocation5 + $0x128] sm:$0xff]
    %v222 = vld [vmem:[#allocation5 + $0x130] sm:$0xff]
    %v223 = vld [vmem:[#allocation5 + $0x138] sm:$0xff]
    %v224 = vld [vmem:[#allocation5 + $0x140] sm:$0xff]
    %v225 = vld [vmem:[#allocation5 + $0x148] sm:$0xff]
    %v226 = vld [vmem:[#allocation5 + $0x150] sm:$0xff]
    %v227 = vld [vmem:[#allocation5 + $0x158] sm:$0xff]
    %v228 = vld [vmem:[#allocation5 + $0x160] sm:$0xff]
    %v229 = vld [vmem:[#allocation5 + $0x168] sm:$0xff]
    %v230 = vld [vmem:[#allocation5 + $0x170] sm:$0xff]
    %v231 = vld [vmem:[#allocation5 + $0x178] sm:$0xff]
    %v232 = vld [vmem:[#allocation5 + $0x180] sm:$0xff]
    %v233 = vld [vmem:[#allocation5 + $0x188] sm:$0xff]
    %v234 = vld [vmem:[#allocation5 + $0x190] sm:$0xff]
    %v235 = vld [vmem:[#allocation5 + $0x198] sm:$0xff]
    %v236 = vld [vmem:[#allocation5 + $0x1a0] sm:$0xff]
    %v237 = vld [vmem:[#allocation5 + $0x1a8] sm:$0xff]
    %v238 = vld [vmem:[#allocation5 + $0x1b0] sm:$0xff]
    %v239 = vld [vmem:[#allocation5 + $0x1b8] sm:$0xff]
    %v240 = vld [vmem:[#allocation5 + $0x1c0] sm:$0xff]
    %v241 = vld [vmem:[#allocation5 + $0x1c8] sm:$0xff]
    %v242 = vld [vmem:[#allocation5 + $0x1d0] sm:$0xff]
    %v243 = vld [vmem:[#allocation5 + $0x1d8] sm:$0xff]
    %v244 = vld [vmem:[#allocation5 + $0x1e0] sm:$0xff]
    %v245 = vld [vmem:[#allocation5 + $0x1e8] sm:$0xff]
    %v246 = vld [vmem:[#allocation5 + $0x1f0] sm:$0xff]
    %v247 = vld [vmem:[#allocation5 + $0x1f8] sm:$0xff]
    %v248 = vld [vmem:[%s6] sm:$0xf]
    %v250 = vperm.slane %v248, 0
    %v251 = vperm.slane %v248, 1
    %v252 = vperm.slane %v248, 2
    %v253 = vperm.slane %v248, 3
    %258 = vmatpush.msra.mxu0 %v244
    %259 = vmatpush.msra.mxu0 %v240
    %260 = vmatpush.msra.mxu0 %v236
    %261 = vmatpush.msra.mxu0 %v232
    %262 = vmatpush.msra.mxu0 %v228
    %263 = vmatpush.msra.mxu0 %v224
    %264 = vmatpush.msra.mxu0 %v220
    %265 = vmatpush.msra.mxu0 %v216
    %266 = vmatpush.msra.mxu0 %v212
    %267 = vmatpush.msra.mxu0 %v208
    %268 = vmatpush.msra.mxu0 %v204
    %269 = vmatpush.msra.mxu0 %v200
    %270 = vmatpush.msra.mxu0 %v196
    %271 = vmatpush.msra.mxu0 %v192
    %272 = vmatpush.msra.mxu0 %v188
    %273 = vmatpush.msra.mxu0 %v184
    %274 = vmatmul.f32.gmra.mxu0 %v180
    %v275 = vpop.f32.mrf.mxu0
    %v276 = vadd.f32 %v250, %v275
    %277 = vmatmul.f32.gmra.mxu0 %v181
    %v278 = vpop.f32.mrf.mxu0
    %v279 = vadd.f32 %v250, %v278
    %280 = vmatmul.f32.gmra.mxu0 %v182
    %v281 = vpop.f32.mrf.mxu0
    %v282 = vadd.f32 %v250, %v281
    %283 = vmatmul.f32.gmra.mxu0 %v183
    %v284 = vpop.f32.mrf.mxu0
    %v285 = vadd.f32 %v250, %v284
    %286 = vdwg.mxu0
    %287 = vmatpush.msra.mxu0 %v245
    %288 = vmatpush.msra.mxu0 %v241
    %289 = vmatpush.msra.mxu0 %v237
    %290 = vmatpush.msra.mxu0 %v233
    %291 = vmatpush.msra.mxu0 %v229
    %292 = vmatpush.msra.mxu0 %v225
    %293 = vmatpush.msra.mxu0 %v221
    %294 = vmatpush.msra.mxu0 %v217
    %295 = vmatpush.msra.mxu0 %v213
    %296 = vmatpush.msra.mxu0 %v209
    %297 = vmatpush.msra.mxu0 %v205
    %298 = vmatpush.msra.mxu0 %v201
    %299 = vmatpush.msra.mxu0 %v197
    %300 = vmatpush.msra.mxu0 %v193
    %301 = vmatpush.msra.mxu0 %v189
    %302 = vmatpush.msra.mxu0 %v185
    %303 = vmatmul.f32.gmra.mxu0 %v180
    %v304 = vpop.f32.mrf.mxu0
    %v305 = vadd.f32 %v251, %v304
    %306 = vmatmul.f32.gmra.mxu0 %v181
    %v307 = vpop.f32.mrf.mxu0
    %v308 = vadd.f32 %v251, %v307
    %309 = vmatmul.f32.gmra.mxu0 %v182
    %v310 = vpop.f32.mrf.mxu0
    %v311 = vadd.f32 %v251, %v310
    %312 = vmatmul.f32.gmra.mxu0 %v183
    %v313 = vpop.f32.mrf.mxu0
    %v314 = vadd.f32 %v251, %v313
    %315 = vdwg.mxu0
    %316 = vmatpush.msra.mxu0 %v246
    %317 = vmatpush.msra.mxu0 %v242
    %318 = vmatpush.msra.mxu0 %v238
    %319 = vmatpush.msra.mxu0 %v234
    %320 = vmatpush.msra.mxu0 %v230
    %321 = vmatpush.msra.mxu0 %v226
    %322 = vmatpush.msra.mxu0 %v222
    %323 = vmatpush.msra.mxu0 %v218
    %324 = vmatpush.msra.mxu0 %v214
    %325 = vmatpush.msra.mxu0 %v210
    %326 = vmatpush.msra.mxu0 %v206
    %327 = vmatpush.msra.mxu0 %v202
    %328 = vmatpush.msra.mxu0 %v198
    %329 = vmatpush.msra.mxu0 %v194
    %330 = vmatpush.msra.mxu0 %v190
    %331 = vmatpush.msra.mxu0 %v186
    %332 = vmatmul.f32.gmra.mxu0 %v180
    %v333 = vpop.f32.mrf.mxu0
    %v334 = vadd.f32 %v252, %v333
    %335 = vmatmul.f32.gmra.mxu0 %v181
    %v336 = vpop.f32.mrf.mxu0
    %v337 = vadd.f32 %v252, %v336
    %338 = vmatmul.f32.gmra.mxu0 %v182
    %v339 = vpop.f32.mrf.mxu0
    %v340 = vadd.f32 %v252, %v339
    %341 = vmatmul.f32.gmra.mxu0 %v183
    %v342 = vpop.f32.mrf.mxu0
    %v343 = vadd.f32 %v252, %v342
    %344 = vdwg.mxu0
    %345 = vmatpush.msra.mxu0 %v247
    %346 = vmatpush.msra.mxu0 %v243
    %347 = vmatpush.msra.mxu0 %v239
    %348 = vmatpush.msra.mxu0 %v235
    %349 = vmatpush.msra.mxu0 %v231
    %350 = vmatpush.msra.mxu0 %v227
    %351 = vmatpush.msra.mxu0 %v223
    %352 = vmatpush.msra.mxu0 %v219
    %353 = vmatpush.msra.mxu0 %v215
    %354 = vmatpush.msra.mxu0 %v211
    %355 = vmatpush.msra.mxu0 %v207
    %356 = vmatpush.msra.mxu0 %v203
    %357 = vmatpush.msra.mxu0 %v199
    %358 = vmatpush.msra.mxu0 %v195
    %359 = vmatpush.msra.mxu0 %v191
    %360 = vmatpush.msra.mxu0 %v187
    %361 = vmatmul.f32.gmra.mxu0 %v180
    %v362 = vpop.f32.mrf.mxu0
    %v363 = vadd.f32 %v253, %v362
    %364 = vmatmul.f32.gmra.mxu0 %v181
    %v365 = vpop.f32.mrf.mxu0
    %v366 = vadd.f32 %v253, %v365
    %367 = vmatmul.f32.gmra.mxu0 %v182
    %v368 = vpop.f32.mrf.mxu0
    %v369 = vadd.f32 %v253, %v368
    %370 = vmatmul.f32.gmra.mxu0 %v183
    %v371 = vpop.f32.mrf.mxu0
    %v372 = vadd.f32 %v253, %v371
    %373 = vdwg.mxu0
    %v374 = vlaneseq
    %v375 = vand.u32 %v374, 127
    %v376 = vadd.s32 %v375, 128
    %v377 = vadd.s32 %v375, 256
    %v378 = vadd.s32 %v375, 384
    %vm379 = vcmp.ge.s32.totalorder %v375, 1
    %vm380 = vcmp.ge.s32.totalorder %v376, 1
    %vm381 = vcmp.ge.s32.totalorder %v377, 1
    %vm382 = vcmp.ge.s32.totalorder %v378, 1
    %vm383 = vcmp.ge.s32.totalorder %v375, 2
    %vm384 = vcmp.ge.s32.totalorder %v376, 2
    %vm385 = vcmp.ge.s32.totalorder %v377, 2
    %vm386 = vcmp.ge.s32.totalorder %v378, 2
    %vm387 = vcmp.ge.s32.totalorder %v375, 4
    %vm388 = vcmp.ge.s32.totalorder %v376, 4
    %vm389 = vcmp.ge.s32.totalorder %v377, 4
    %vm390 = vcmp.ge.s32.totalorder %v378, 4
    %vm391 = vcmp.ge.s32.totalorder %v375, 8
    %vm392 = vcmp.ge.s32.totalorder %v376, 8
    %vm393 = vcmp.ge.s32.totalorder %v377, 8
    %vm394 = vcmp.ge.s32.totalorder %v378, 8
    %vm395 = vcmp.ge.s32.totalorder %v375, 16
    %vm396 = vcmp.ge.s32.totalorder %v376, 16
    %vm397 = vcmp.ge.s32.totalorder %v377, 16
    %vm398 = vcmp.ge.s32.totalorder %v378, 16
    %vm399 = vcmp.ge.s32.totalorder %v375, 32
    %vm400 = vcmp.ge.s32.totalorder %v376, 32
    %vm401 = vcmp.ge.s32.totalorder %v377, 32
    %vm402 = vcmp.ge.s32.totalorder %v378, 32
    %vm403 = vcmp.ge.s32.totalorder %v375, 64
    %vm404 = vcmp.ge.s32.totalorder %v376, 64
    %vm405 = vcmp.ge.s32.totalorder %v377, 64
    %vm406 = vcmp.ge.s32.totalorder %v378, 64
    %vm407 = vcmp.ge.s32.totalorder %v375, 128
    %vm408 = vcmp.ge.s32.totalorder %v376, 128
    %vm409 = vcmp.ge.s32.totalorder %v377, 128
    %vm410 = vcmp.ge.s32.totalorder %v378, 128
    %vm411 = vcmp.ge.s32.totalorder %v375, 256
    %vm412 = vcmp.ge.s32.totalorder %v376, 256
    %vm413 = vcmp.ge.s32.totalorder %v377, 256
    %vm414 = vcmp.ge.s32.totalorder %v378, 256
    %v415 = vmax.f32 %v276, %v305
    %v416 = vmax.f32 %v415, %v334
    %v417 = vmax.f32 %v416, %v363
    %418 = vmax.xlane.f32.xlu0 %v417
    %v419 = vpop.xlane.xlu0 %418
    %v420 = vmax.f32 %v279, %v308
    %v421 = vmax.f32 %v420, %v337
    %v422 = vmax.f32 %v421, %v366
    %423 = vmax.xlane.f32.xlu0 %v422
    %v424 = vpop.xlane.xlu0 %423
    %v425 = vmax.f32 %v282, %v311
    %v426 = vmax.f32 %v425, %v340
    %v427 = vmax.f32 %v426, %v369
    %428 = vmax.xlane.f32.xlu0 %v427
    %v429 = vpop.xlane.xlu0 %428
    %v430 = vmax.f32 %v285, %v314
    %v431 = vmax.f32 %v430, %v343
    %v432 = vmax.f32 %v431, %v372
    %433 = vmax.xlane.f32.xlu0 %v432
    %v434 = vpop.xlane.xlu0 %433
    %v435 = vsub.f32 %v276, %v419
    %v436 = vsub.f32 %v305, %v419
    %v437 = vsub.f32 %v334, %v419
    %v438 = vsub.f32 %v363, %v419
    %v439 = vsub.f32 %v279, %v424
    %v440 = vsub.f32 %v308, %v424
    %v441 = vsub.f32 %v337, %v424
    %v442 = vsub.f32 %v366, %v424
    %v443 = vsub.f32 %v282, %v429
    %v444 = vsub.f32 %v311, %v429
    %v445 = vsub.f32 %v340, %v429
    %v446 = vsub.f32 %v369, %v429
    %v447 = vsub.f32 %v285, %v434
    %v448 = vsub.f32 %v314, %v434
    %v449 = vsub.f32 %v343, %v434
    %v450 = vsub.f32 %v372, %v434
    %v451 = vmul.f32 %v435, 1.442695
    %v452 = vpow.pop %v451
    %v453 = vmul.f32 %v436, 1.442695
    %v454 = vpow.pop %v453
    %v455 = vmul.f32 %v437, 1.442695
    %v456 = vpow.pop %v455
    %v457 = vmul.f32 %v438, 1.442695
    %v458 = vpow.pop %v457
    %v459 = vmul.f32 %v439, 1.442695
    %v460 = vpow.pop %v459
    %v461 = vmul.f32 %v440, 1.442695
    %v462 = vpow.pop %v461
    %v463 = vmul.f32 %v441, 1.442695
    %v464 = vpow.pop %v463
    %v465 = vmul.f32 %v442, 1.442695
    %v466 = vpow.pop %v465
    %v467 = vmul.f32 %v443, 1.442695
    %v468 = vpow.pop %v467
    %v469 = vmul.f32 %v444, 1.442695
    %v470 = vpow.pop %v469
    %v471 = vmul.f32 %v445, 1.442695
    %v472 = vpow.pop %v471
    %v473 = vmul.f32 %v446, 1.442695
    %v474 = vpow.pop %v473
    %v475 = vmul.f32 %v447, 1.442695
    %v476 = vpow.pop %v475
    %v477 = vmul.f32 %v448, 1.442695
    %v478 = vpow.pop %v477
    %v479 = vmul.f32 %v449, 1.442695
    %v480 = vpow.pop %v479
    %v481 = vmul.f32 %v450, 1.442695
    %v482 = vpow.pop %v481
    %483 = vrot.lane.b32.xlu0 %v452, 1
    %v484 = vpop.permute.xlu0 %483
    %485 = vrot.lane.b32.xlu0 %v460, 1
    %v486 = vpop.permute.xlu0 %485
    %487 = vrot.lane.b32.xlu0 %v468, 1
    %v488 = vpop.permute.xlu0 %487
    %489 = vrot.lane.b32.xlu0 %v476, 1
    %v490 = vpop.permute.xlu0 %489
    %491 = vrot.lane.b32.xlu0 %v454, 1
    %v492 = vpop.permute.xlu0 %491
    %493 = vrot.lane.b32.xlu0 %v462, 1
    %v494 = vpop.permute.xlu0 %493
    %495 = vrot.lane.b32.xlu0 %v470, 1
    %v496 = vpop.permute.xlu0 %495
    %497 = vrot.lane.b32.xlu0 %v478, 1
    %v498 = vpop.permute.xlu0 %497
    %499 = vrot.lane.b32.xlu0 %v456, 1
    %v500 = vpop.permute.xlu0 %499
    %501 = vrot.lane.b32.xlu0 %v464, 1
    %v502 = vpop.permute.xlu0 %501
    %503 = vrot.lane.b32.xlu0 %v472, 1
    %v504 = vpop.permute.xlu0 %503
    %505 = vrot.lane.b32.xlu0 %v480, 1
    %v506 = vpop.permute.xlu0 %505
    %507 = vrot.lane.b32.xlu0 %v458, 1
    %v508 = vpop.permute.xlu0 %507
    %509 = vrot.lane.b32.xlu0 %v466, 1
    %v510 = vpop.permute.xlu0 %509
    %511 = vrot.lane.b32.xlu0 %v474, 1
    %v512 = vpop.permute.xlu0 %511
    %513 = vrot.lane.b32.xlu0 %v482, 1
    %v514 = vpop.permute.xlu0 %513
    %vm515 = vcmp.lt.s32.totalorder %v375, 1
    %v516 = vsel %vm515, %v500, %v508
    %v517 = vsel %vm515, %v502, %v510
    %v518 = vsel %vm515, %v504, %v512
    %v519 = vsel %vm515, %v506, %v514
    %v520 = vsel %vm515, %v492, %v500
    %v521 = vsel %vm515, %v494, %v502
    %v522 = vsel %vm515, %v496, %v504
    %v523 = vsel %vm515, %v498, %v506
    %v524 = vsel %vm515, %v484, %v492
    %v525 = vsel %vm515, %v486, %v494
    %v526 = vsel %vm515, %v488, %v496
    %v527 = vsel %vm515, %v490, %v498
    %v528 = vsel %vm515, %v508, %v484
    %v529 = vsel %vm515, %v510, %v486
    %v530 = vsel %vm515, %v512, %v488
    %v531 = vsel %vm515, %v514, %v490
    %v532 = vadd.f32 %v452, %v528
    %v533 = vadd.f32 %v454, %v524
    %v534 = vadd.f32 %v456, %v520
    %v535 = vadd.f32 %v458, %v516
    %v536 = vadd.f32 %v460, %v529
    %v537 = vadd.f32 %v462, %v525
    %v538 = vadd.f32 %v464, %v521
    %v539 = vadd.f32 %v466, %v517
    %v540 = vadd.f32 %v468, %v530
    %v541 = vadd.f32 %v470, %v526
    %v542 = vadd.f32 %v472, %v522
    %v543 = vadd.f32 %v474, %v518
    %v544 = vadd.f32 %v476, %v531
    %v545 = vadd.f32 %v478, %v527
    %v546 = vadd.f32 %v480, %v523
    %v547 = vadd.f32 %v482, %v519
    %v548 = vsel %vm379, 1, 0
    %v549 = vsel %vm380, 1, 0
    %v550 = vsel %vm381, 1, 0
    %v551 = vsel %vm382, 1, 0
    %vm552 = vcmp.eq.s32.totalorder %v548, 1
    %vm553 = vcmp.eq.s32.totalorder %v549, 1
    %vm554 = vcmp.eq.s32.totalorder %v550, 1
    %vm555 = vcmp.eq.s32.totalorder %v551, 1
    %v556 = vsel %vm552, %v532, %v452
    %v557 = vsel %vm553, %v533, %v454
    %v558 = vsel %vm554, %v534, %v456
    %v559 = vsel %vm555, %v535, %v458
    %v560 = vsel %vm552, %v536, %v460
    %v561 = vsel %vm553, %v537, %v462
    %v562 = vsel %vm554, %v538, %v464
    %v563 = vsel %vm555, %v539, %v466
    %v564 = vsel %vm552, %v540, %v468
    %v565 = vsel %vm553, %v541, %v470
    %v566 = vsel %vm554, %v542, %v472
    %v567 = vsel %vm555, %v543, %v474
    %v568 = vsel %vm552, %v544, %v476
    %v569 = vsel %vm553, %v545, %v478
    %v570 = vsel %vm554, %v546, %v480
    %v571 = vsel %vm555, %v547, %v482
    %572 = vrot.lane.b32.xlu0 %v556, 2
    %v573 = vpop.permute.xlu0 %572
    %574 = vrot.lane.b32.xlu0 %v560, 2
    %v575 = vpop.permute.xlu0 %574
    %576 = vrot.lane.b32.xlu0 %v564, 2
    %v577 = vpop.permute.xlu0 %576
    %578 = vrot.lane.b32.xlu0 %v568, 2
    %v579 = vpop.permute.xlu0 %578
    %580 = vrot.lane.b32.xlu0 %v557, 2
    %v581 = vpop.permute.xlu0 %580
    %582 = vrot.lane.b32.xlu0 %v561, 2
    %v583 = vpop.permute.xlu0 %582
    %584 = vrot.lane.b32.xlu0 %v565, 2
    %v585 = vpop.permute.xlu0 %584
    %586 = vrot.lane.b32.xlu0 %v569, 2
    %v587 = vpop.permute.xlu0 %586
    %588 = vrot.lane.b32.xlu0 %v558, 2
    %v589 = vpop.permute.xlu0 %588
    %590 = vrot.lane.b32.xlu0 %v562, 2
    %v591 = vpop.permute.xlu0 %590
    %592 = vrot.lane.b32.xlu0 %v566, 2
    %v593 = vpop.permute.xlu0 %592
    %594 = vrot.lane.b32.xlu0 %v570, 2
    %v595 = vpop.permute.xlu0 %594
    %596 = vrot.lane.b32.xlu0 %v559, 2
    %v597 = vpop.permute.xlu0 %596
    %598 = vrot.lane.b32.xlu0 %v563, 2
    %v599 = vpop.permute.xlu0 %598
    %600 = vrot.lane.b32.xlu0 %v567, 2
    %v601 = vpop.permute.xlu0 %600
    %602 = vrot.lane.b32.xlu0 %v571, 2
    %v603 = vpop.permute.xlu0 %602
    %vm604 = vcmp.lt.s32.totalorder %v375, 2
    %v605 = vsel %vm604, %v589, %v597
    %v606 = vsel %vm604, %v591, %v599
    %v607 = vsel %vm604, %v593, %v601
    %v608 = vsel %vm604, %v595, %v603
    %v609 = vsel %vm604, %v581, %v589
    %v610 = vsel %vm604, %v583, %v591
    %v611 = vsel %vm604, %v585, %v593
    %v612 = vsel %vm604, %v587, %v595
    %v613 = vsel %vm604, %v573, %v581
    %v614 = vsel %vm604, %v575, %v583
    %v615 = vsel %vm604, %v577, %v585
    %v616 = vsel %vm604, %v579, %v587
    %v617 = vsel %vm604, %v597, %v573
    %v618 = vsel %vm604, %v599, %v575
    %v619 = vsel %vm604, %v601, %v577
    %v620 = vsel %vm604, %v603, %v579
    %v621 = vadd.f32 %v556, %v617
    %v622 = vadd.f32 %v557, %v613
    %v623 = vadd.f32 %v558, %v609
    %v624 = vadd.f32 %v559, %v605
    %v625 = vadd.f32 %v560, %v618
    %v626 = vadd.f32 %v561, %v614
    %v627 = vadd.f32 %v562, %v610
    %v628 = vadd.f32 %v563, %v606
    %v629 = vadd.f32 %v564, %v619
    %v630 = vadd.f32 %v565, %v615
    %v631 = vadd.f32 %v566, %v611
    %v632 = vadd.f32 %v567, %v607
    %v633 = vadd.f32 %v568, %v620
    %v634 = vadd.f32 %v569, %v616
    %v635 = vadd.f32 %v570, %v612
    %v636 = vadd.f32 %v571, %v608
    %v637 = vsel %vm383, 1, 0
    %v638 = vsel %vm384, 1, 0
    %v639 = vsel %vm385, 1, 0
    %v640 = vsel %vm386, 1, 0
    %vm641 = vcmp.eq.s32.totalorder %v637, 1
    %vm642 = vcmp.eq.s32.totalorder %v638, 1
    %vm643 = vcmp.eq.s32.totalorder %v639, 1
    %vm644 = vcmp.eq.s32.totalorder %v640, 1
    %v645 = vsel %vm641, %v621, %v556
    %v646 = vsel %vm642, %v622, %v557
    %v647 = vsel %vm643, %v623, %v558
    %v648 = vsel %vm644, %v624, %v559
    %v649 = vsel %vm641, %v625, %v560
    %v650 = vsel %vm642, %v626, %v561
    %v651 = vsel %vm643, %v627, %v562
    %v652 = vsel %vm644, %v628, %v563
    %v653 = vsel %vm641, %v629, %v564
    %v654 = vsel %vm642, %v630, %v565
    %v655 = vsel %vm643, %v631, %v566
    %v656 = vsel %vm644, %v632, %v567
    %v657 = vsel %vm641, %v633, %v568
    %v658 = vsel %vm642, %v634, %v569
    %v659 = vsel %vm643, %v635, %v570
    %v660 = vsel %vm644, %v636, %v571
    %661 = vrot.lane.b32.xlu0 %v645, 4
    %v662 = vpop.permute.xlu0 %661
    %663 = vrot.lane.b32.xlu0 %v649, 4
    %v664 = vpop.permute.xlu0 %663
    %665 = vrot.lane.b32.xlu0 %v653, 4
    %v666 = vpop.permute.xlu0 %665
    %667 = vrot.lane.b32.xlu0 %v657, 4
    %v668 = vpop.permute.xlu0 %667
    %669 = vrot.lane.b32.xlu0 %v646, 4
    %v670 = vpop.permute.xlu0 %669
    %671 = vrot.lane.b32.xlu0 %v650, 4
    %v672 = vpop.permute.xlu0 %671
    %673 = vrot.lane.b32.xlu0 %v654, 4
    %v674 = vpop.permute.xlu0 %673
    %675 = vrot.lane.b32.xlu0 %v658, 4
    %v676 = vpop.permute.xlu0 %675
    %677 = vrot.lane.b32.xlu0 %v647, 4
    %v678 = vpop.permute.xlu0 %677
    %679 = vrot.lane.b32.xlu0 %v651, 4
    %v680 = vpop.permute.xlu0 %679
    %681 = vrot.lane.b32.xlu0 %v655, 4
    %v682 = vpop.permute.xlu0 %681
    %683 = vrot.lane.b32.xlu0 %v659, 4
    %v684 = vpop.permute.xlu0 %683
    %685 = vrot.lane.b32.xlu0 %v648, 4
    %v686 = vpop.permute.xlu0 %685
    %687 = vrot.lane.b32.xlu0 %v652, 4
    %v688 = vpop.permute.xlu0 %687
    %689 = vrot.lane.b32.xlu0 %v656, 4
    %v690 = vpop.permute.xlu0 %689
    %691 = vrot.lane.b32.xlu0 %v660, 4
    %v692 = vpop.permute.xlu0 %691
    %vm693 = vcmp.lt.s32.totalorder %v375, 4
    %v694 = vsel %vm693, %v678, %v686
    %v695 = vsel %vm693, %v680, %v688
    %v696 = vsel %vm693, %v682, %v690
    %v697 = vsel %vm693, %v684, %v692
    %v698 = vsel %vm693, %v670, %v678
    %v699 = vsel %vm693, %v672, %v680
    %v700 = vsel %vm693, %v674, %v682
    %v701 = vsel %vm693, %v676, %v684
    %v702 = vsel %vm693, %v662, %v670
    %v703 = vsel %vm693, %v664, %v672
    %v704 = vsel %vm693, %v666, %v674
    %v705 = vsel %vm693, %v668, %v676
    %v706 = vsel %vm693, %v686, %v662
    %v707 = vsel %vm693, %v688, %v664
    %v708 = vsel %vm693, %v690, %v666
    %v709 = vsel %vm693, %v692, %v668
    %v710 = vadd.f32 %v645, %v706
    %v711 = vadd.f32 %v646, %v702
    %v712 = vadd.f32 %v647, %v698
    %v713 = vadd.f32 %v648, %v694
    %v714 = vadd.f32 %v649, %v707
    %v715 = vadd.f32 %v650, %v703
    %v716 = vadd.f32 %v651, %v699
    %v717 = vadd.f32 %v652, %v695
    %v718 = vadd.f32 %v653, %v708
    %v719 = vadd.f32 %v654, %v704
    %v720 = vadd.f32 %v655, %v700
    %v721 = vadd.f32 %v656, %v696
    %v722 = vadd.f32 %v657, %v709
    %v723 = vadd.f32 %v658, %v705
    %v724 = vadd.f32 %v659, %v701
    %v725 = vadd.f32 %v660, %v697
    %v726 = vsel %vm387, 1, 0
    %v727 = vsel %vm388, 1, 0
    %v728 = vsel %vm389, 1, 0
    %v729 = vsel %vm390, 1, 0
    %vm730 = vcmp.eq.s32.totalorder %v726, 1
    %vm731 = vcmp.eq.s32.totalorder %v727, 1
    %vm732 = vcmp.eq.s32.totalorder %v728, 1
    %vm733 = vcmp.eq.s32.totalorder %v729, 1
    %v734 = vsel %vm730, %v710, %v645
    %v735 = vsel %vm731, %v711, %v646
    %v736 = vsel %vm732, %v712, %v647
    %v737 = vsel %vm733, %v713, %v648
    %v738 = vsel %vm730, %v714, %v649
    %v739 = vsel %vm731, %v715, %v650
    %v740 = vsel %vm732, %v716, %v651
    %v741 = vsel %vm733, %v717, %v652
    %v742 = vsel %vm730, %v718, %v653
    %v743 = vsel %vm731, %v719, %v654
    %v744 = vsel %vm732, %v720, %v655
    %v745 = vsel %vm733, %v721, %v656
    %v746 = vsel %vm730, %v722, %v657
    %v747 = vsel %vm731, %v723, %v658
    %v748 = vsel %vm732, %v724, %v659
    %v749 = vsel %vm733, %v725, %v660
    %750 = vrot.lane.b32.xlu0 %v734, 8
    %v751 = vpop.permute.xlu0 %750
    %752 = vrot.lane.b32.xlu0 %v738, 8
    %v753 = vpop.permute.xlu0 %752
    %754 = vrot.lane.b32.xlu0 %v742, 8
    %v755 = vpop.permute.xlu0 %754
    %756 = vrot.lane.b32.xlu0 %v746, 8
    %v757 = vpop.permute.xlu0 %756
    %758 = vrot.lane.b32.xlu0 %v735, 8
    %v759 = vpop.permute.xlu0 %758
    %760 = vrot.lane.b32.xlu0 %v739, 8
    %v761 = vpop.permute.xlu0 %760
    %762 = vrot.lane.b32.xlu0 %v743, 8
    %v763 = vpop.permute.xlu0 %762
    %764 = vrot.lane.b32.xlu0 %v747, 8
    %v765 = vpop.permute.xlu0 %764
    %766 = vrot.lane.b32.xlu0 %v736, 8
    %v767 = vpop.permute.xlu0 %766
    %768 = vrot.lane.b32.xlu0 %v740, 8
    %v769 = vpop.permute.xlu0 %768
    %770 = vrot.lane.b32.xlu0 %v744, 8
    %v771 = vpop.permute.xlu0 %770
    %772 = vrot.lane.b32.xlu0 %v748, 8
    %v773 = vpop.permute.xlu0 %772
    %774 = vrot.lane.b32.xlu0 %v737, 8
    %v775 = vpop.permute.xlu0 %774
    %776 = vrot.lane.b32.xlu0 %v741, 8
    %v777 = vpop.permute.xlu0 %776
    %778 = vrot.lane.b32.xlu0 %v745, 8
    %v779 = vpop.permute.xlu0 %778
    %780 = vrot.lane.b32.xlu0 %v749, 8
    %v781 = vpop.permute.xlu0 %780
    %vm782 = vcmp.lt.s32.totalorder %v375, 8
    %v783 = vsel %vm782, %v767, %v775
    %v784 = vsel %vm782, %v769, %v777
    %v785 = vsel %vm782, %v771, %v779
    %v786 = vsel %vm782, %v773, %v781
    %v787 = vsel %vm782, %v759, %v767
    %v788 = vsel %vm782, %v761, %v769
    %v789 = vsel %vm782, %v763, %v771
    %v790 = vsel %vm782, %v765, %v773
    %v791 = vsel %vm782, %v751, %v759
    %v792 = vsel %vm782, %v753, %v761
    %v793 = vsel %vm782, %v755, %v763
    %v794 = vsel %vm782, %v757, %v765
    %v795 = vsel %vm782, %v775, %v751
    %v796 = vsel %vm782, %v777, %v753
    %v797 = vsel %vm782, %v779, %v755
    %v798 = vsel %vm782, %v781, %v757
    %v799 = vadd.f32 %v734, %v795
    %v800 = vadd.f32 %v735, %v791
    %v801 = vadd.f32 %v736, %v787
    %v802 = vadd.f32 %v737, %v783
    %v803 = vadd.f32 %v738, %v796
    %v804 = vadd.f32 %v739, %v792
    %v805 = vadd.f32 %v740, %v788
    %v806 = vadd.f32 %v741, %v784
    %v807 = vadd.f32 %v742, %v797
    %v808 = vadd.f32 %v743, %v793
    %v809 = vadd.f32 %v744, %v789
    %v810 = vadd.f32 %v745, %v785
    %v811 = vadd.f32 %v746, %v798
    %v812 = vadd.f32 %v747, %v794
    %v813 = vadd.f32 %v748, %v790
    %v814 = vadd.f32 %v749, %v786
    %v815 = vsel %vm391, 1, 0
    %v816 = vsel %vm392, 1, 0
    %v817 = vsel %vm393, 1, 0
    %v818 = vsel %vm394, 1, 0
    %vm819 = vcmp.eq.s32.totalorder %v815, 1
    %vm820 = vcmp.eq.s32.totalorder %v816, 1
    %vm821 = vcmp.eq.s32.totalorder %v817, 1
    %vm822 = vcmp.eq.s32.totalorder %v818, 1
    %v823 = vsel %vm819, %v799, %v734
    %v824 = vsel %vm820, %v800, %v735
    %v825 = vsel %vm821, %v801, %v736
    %v826 = vsel %vm822, %v802, %v737
    %v827 = vsel %vm819, %v803, %v738
    %v828 = vsel %vm820, %v804, %v739
    %v829 = vsel %vm821, %v805, %v740
    %v830 = vsel %vm822, %v806, %v741
    %v831 = vsel %vm819, %v807, %v742
    %v832 = vsel %vm820, %v808, %v743
    %v833 = vsel %vm821, %v809, %v744
    %v834 = vsel %vm822, %v810, %v745
    %v835 = vsel %vm819, %v811, %v746
    %v836 = vsel %vm820, %v812, %v747
    %v837 = vsel %vm821, %v813, %v748
    %v838 = vsel %vm822, %v814, %v749
    %839 = vrot.lane.b32.xlu0 %v823, 16
    %v840 = vpop.permute.xlu0 %839
    %841 = vrot.lane.b32.xlu0 %v827, 16
    %v842 = vpop.permute.xlu0 %841
    %843 = vrot.lane.b32.xlu0 %v831, 16
    %v844 = vpop.permute.xlu0 %843
    %845 = vrot.lane.b32.xlu0 %v835, 16
    %v846 = vpop.permute.xlu0 %845
    %847 = vrot.lane.b32.xlu0 %v824, 16
    %v848 = vpop.permute.xlu0 %847
    %849 = vrot.lane.b32.xlu0 %v828, 16
    %v850 = vpop.permute.xlu0 %849
    %851 = vrot.lane.b32.xlu0 %v832, 16
    %v852 = vpop.permute.xlu0 %851
    %853 = vrot.lane.b32.xlu0 %v836, 16
    %v854 = vpop.permute.xlu0 %853
    %855 = vrot.lane.b32.xlu0 %v825, 16
    %v856 = vpop.permute.xlu0 %855
    %857 = vrot.lane.b32.xlu0 %v829, 16
    %v858 = vpop.permute.xlu0 %857
    %859 = vrot.lane.b32.xlu0 %v833, 16
    %v860 = vpop.permute.xlu0 %859
    %861 = vrot.lane.b32.xlu0 %v837, 16
    %v862 = vpop.permute.xlu0 %861
    %863 = vrot.lane.b32.xlu0 %v826, 16
    %v864 = vpop.permute.xlu0 %863
    %865 = vrot.lane.b32.xlu0 %v830, 16
    %v866 = vpop.permute.xlu0 %865
    %867 = vrot.lane.b32.xlu0 %v834, 16
    %v868 = vpop.permute.xlu0 %867
    %869 = vrot.lane.b32.xlu0 %v838, 16
    %v870 = vpop.permute.xlu0 %869
    %vm871 = vcmp.lt.s32.totalorder %v375, 16
    %v872 = vsel %vm871, %v856, %v864
    %v873 = vsel %vm871, %v858, %v866
    %v874 = vsel %vm871, %v860, %v868
    %v875 = vsel %vm871, %v862, %v870
    %v876 = vsel %vm871, %v848, %v856
    %v877 = vsel %vm871, %v850, %v858
    %v878 = vsel %vm871, %v852, %v860
    %v879 = vsel %vm871, %v854, %v862
    %v880 = vsel %vm871, %v840, %v848
    %v881 = vsel %vm871, %v842, %v850
    %v882 = vsel %vm871, %v844, %v852
    %v883 = vsel %vm871, %v846, %v854
    %v884 = vsel %vm871, %v864, %v840
    %v885 = vsel %vm871, %v866, %v842
    %v886 = vsel %vm871, %v868, %v844
    %v887 = vsel %vm871, %v870, %v846
    %v888 = vadd.f32 %v823, %v884
    %v889 = vadd.f32 %v824, %v880
    %v890 = vadd.f32 %v825, %v876
    %v891 = vadd.f32 %v826, %v872
    %v892 = vadd.f32 %v827, %v885
    %v893 = vadd.f32 %v828, %v881
    %v894 = vadd.f32 %v829, %v877
    %v895 = vadd.f32 %v830, %v873
    %v896 = vadd.f32 %v831, %v886
    %v897 = vadd.f32 %v832, %v882
    %v898 = vadd.f32 %v833, %v878
    %v899 = vadd.f32 %v834, %v874
    %v900 = vadd.f32 %v835, %v887
    %v901 = vadd.f32 %v836, %v883
    %v902 = vadd.f32 %v837, %v879
    %v903 = vadd.f32 %v838, %v875
    %v904 = vsel %vm395, 1, 0
    %v905 = vsel %vm396, 1, 0
    %v906 = vsel %vm397, 1, 0
    %v907 = vsel %vm398, 1, 0
    %vm908 = vcmp.eq.s32.totalorder %v904, 1
    %vm909 = vcmp.eq.s32.totalorder %v905, 1
    %vm910 = vcmp.eq.s32.totalorder %v906, 1
    %vm911 = vcmp.eq.s32.totalorder %v907, 1
    %v912 = vsel %vm908, %v888, %v823
    %v913 = vsel %vm909, %v889, %v824
    %v914 = vsel %vm910, %v890, %v825
    %v915 = vsel %vm911, %v891, %v826
    %v916 = vsel %vm908, %v892, %v827
    %v917 = vsel %vm909, %v893, %v828
    %v918 = vsel %vm910, %v894, %v829
    %v919 = vsel %vm911, %v895, %v830
    %v920 = vsel %vm908, %v896, %v831
    %v921 = vsel %vm909, %v897, %v832
    %v922 = vsel %vm910, %v898, %v833
    %v923 = vsel %vm911, %v899, %v834
    %v924 = vsel %vm908, %v900, %v835
    %v925 = vsel %vm909, %v901, %v836
    %v926 = vsel %vm910, %v902, %v837
    %v927 = vsel %vm911, %v903, %v838
    %928 = vrot.lane.b32.xlu0 %v912, 32
    %v929 = vpop.permute.xlu0 %928
    %930 = vrot.lane.b32.xlu0 %v916, 32
    %v931 = vpop.permute.xlu0 %930
    %932 = vrot.lane.b32.xlu0 %v920, 32
    %v933 = vpop.permute.xlu0 %932
    %934 = vrot.lane.b32.xlu0 %v924, 32
    %v935 = vpop.permute.xlu0 %934
    %936 = vrot.lane.b32.xlu0 %v913, 32
    %v937 = vpop.permute.xlu0 %936
    %938 = vrot.lane.b32.xlu0 %v917, 32
    %v939 = vpop.permute.xlu0 %938
    %940 = vrot.lane.b32.xlu0 %v921, 32
    %v941 = vpop.permute.xlu0 %940
    %942 = vrot.lane.b32.xlu0 %v925, 32
    %v943 = vpop.permute.xlu0 %942
    %944 = vrot.lane.b32.xlu0 %v914, 32
    %v945 = vpop.permute.xlu0 %944
    %946 = vrot.lane.b32.xlu0 %v918, 32
    %v947 = vpop.permute.xlu0 %946
    %948 = vrot.lane.b32.xlu0 %v922, 32
    %v949 = vpop.permute.xlu0 %948
    %950 = vrot.lane.b32.xlu0 %v926, 32
    %v951 = vpop.permute.xlu0 %950
    %952 = vrot.lane.b32.xlu0 %v915, 32
    %v953 = vpop.permute.xlu0 %952
    %954 = vrot.lane.b32.xlu0 %v919, 32
    %v955 = vpop.permute.xlu0 %954
    %956 = vrot.lane.b32.xlu0 %v923, 32
    %v957 = vpop.permute.xlu0 %956
    %958 = vrot.lane.b32.xlu0 %v927, 32
    %v959 = vpop.permute.xlu0 %958
    %vm960 = vcmp.lt.s32.totalorder %v375, 32
    %v961 = vsel %vm960, %v945, %v953
    %v962 = vsel %vm960, %v947, %v955
    %v963 = vsel %vm960, %v949, %v957
    %v964 = vsel %vm960, %v951, %v959
    %v965 = vsel %vm960, %v937, %v945
    %v966 = vsel %vm960, %v939, %v947
    %v967 = vsel %vm960, %v941, %v949
    %v968 = vsel %vm960, %v943, %v951
    %v969 = vsel %vm960, %v929, %v937
    %v970 = vsel %vm960, %v931, %v939
    %v971 = vsel %vm960, %v933, %v941
    %v972 = vsel %vm960, %v935, %v943
    %v973 = vsel %vm960, %v953, %v929
    %v974 = vsel %vm960, %v955, %v931
    %v975 = vsel %vm960, %v957, %v933
    %v976 = vsel %vm960, %v959, %v935
    %v977 = vadd.f32 %v912, %v973
    %v978 = vadd.f32 %v913, %v969
    %v979 = vadd.f32 %v914, %v965
    %v980 = vadd.f32 %v915, %v961
    %v981 = vadd.f32 %v916, %v974
    %v982 = vadd.f32 %v917, %v970
    %v983 = vadd.f32 %v918, %v966
    %v984 = vadd.f32 %v919, %v962
    %v985 = vadd.f32 %v920, %v975
    %v986 = vadd.f32 %v921, %v971
    %v987 = vadd.f32 %v922, %v967
    %v988 = vadd.f32 %v923, %v963
    %v989 = vadd.f32 %v924, %v976
    %v990 = vadd.f32 %v925, %v972
    %v991 = vadd.f32 %v926, %v968
    %v992 = vadd.f32 %v927, %v964
    %v993 = vsel %vm399, 1, 0
    %v994 = vsel %vm400, 1, 0
    %v995 = vsel %vm401, 1, 0
    %v996 = vsel %vm402, 1, 0
    %vm997 = vcmp.eq.s32.totalorder %v993, 1
    %vm998 = vcmp.eq.s32.totalorder %v994, 1
    %vm999 = vcmp.eq.s32.totalorder %v995, 1
    %vm1000 = vcmp.eq.s32.totalorder %v996, 1
    %v1001 = vsel %vm997, %v977, %v912
    %v1002 = vsel %vm998, %v978, %v913
    %v1003 = vsel %vm999, %v979, %v914
    %v1004 = vsel %vm1000, %v980, %v915
    %v1005 = vsel %vm997, %v981, %v916
    %v1006 = vsel %vm998, %v982, %v917
    %v1007 = vsel %vm999, %v983, %v918
    %v1008 = vsel %vm1000, %v984, %v919
    %v1009 = vsel %vm997, %v985, %v920
    %v1010 = vsel %vm998, %v986, %v921
    %v1011 = vsel %vm999, %v987, %v922
    %v1012 = vsel %vm1000, %v988, %v923
    %v1013 = vsel %vm997, %v989, %v924
    %v1014 = vsel %vm998, %v990, %v925
    %v1015 = vsel %vm999, %v991, %v926
    %v1016 = vsel %vm1000, %v992, %v927
    %1017 = vrot.lane.b32.xlu0 %v1001, 64
    %v1018 = vpop.permute.xlu0 %1017
    %1019 = vrot.lane.b32.xlu0 %v1005, 64
    %v1020 = vpop.permute.xlu0 %1019
    %1021 = vrot.lane.b32.xlu0 %v1009, 64
    %v1022 = vpop.permute.xlu0 %1021
    %1023 = vrot.lane.b32.xlu0 %v1013, 64
    %v1024 = vpop.permute.xlu0 %1023
    %1025 = vrot.lane.b32.xlu0 %v1002, 64
    %v1026 = vpop.permute.xlu0 %1025
    %1027 = vrot.lane.b32.xlu0 %v1006, 64
    %v1028 = vpop.permute.xlu0 %1027
    %1029 = vrot.lane.b32.xlu0 %v1010, 64
    %v1030 = vpop.permute.xlu0 %1029
    %1031 = vrot.lane.b32.xlu0 %v1014, 64
    %v1032 = vpop.permute.xlu0 %1031
    %1033 = vrot.lane.b32.xlu0 %v1003, 64
    %v1034 = vpop.permute.xlu0 %1033
    %1035 = vrot.lane.b32.xlu0 %v1007, 64
    %v1036 = vpop.permute.xlu0 %1035
    %1037 = vrot.lane.b32.xlu0 %v1011, 64
    %v1038 = vpop.permute.xlu0 %1037
    %1039 = vrot.lane.b32.xlu0 %v1015, 64
    %v1040 = vpop.permute.xlu0 %1039
    %1041 = vrot.lane.b32.xlu0 %v1004, 64
    %v1042 = vpop.permute.xlu0 %1041
    %1043 = vrot.lane.b32.xlu0 %v1008, 64
    %v1044 = vpop.permute.xlu0 %1043
    %1045 = vrot.lane.b32.xlu0 %v1012, 64
    %v1046 = vpop.permute.xlu0 %1045
    %1047 = vrot.lane.b32.xlu0 %v1016, 64
    %v1048 = vpop.permute.xlu0 %1047
    %vm1049 = vcmp.lt.s32.totalorder %v375, 64
    %v1050 = vsel %vm1049, %v1034, %v1042
    %v1051 = vsel %vm1049, %v1036, %v1044
    %v1052 = vsel %vm1049, %v1038, %v1046
    %v1053 = vsel %vm1049, %v1040, %v1048
    %v1054 = vsel %vm1049, %v1026, %v1034
    %v1055 = vsel %vm1049, %v1028, %v1036
    %v1056 = vsel %vm1049, %v1030, %v1038
    %v1057 = vsel %vm1049, %v1032, %v1040
    %v1058 = vsel %vm1049, %v1018, %v1026
    %v1059 = vsel %vm1049, %v1020, %v1028
    %v1060 = vsel %vm1049, %v1022, %v1030
    %v1061 = vsel %vm1049, %v1024, %v1032
    %v1062 = vsel %vm1049, %v1042, %v1018
    %v1063 = vsel %vm1049, %v1044, %v1020
    %v1064 = vsel %vm1049, %v1046, %v1022
    %v1065 = vsel %vm1049, %v1048, %v1024
    %v1066 = vadd.f32 %v1001, %v1062
    %v1067 = vadd.f32 %v1002, %v1058
    %v1068 = vadd.f32 %v1003, %v1054
    %v1069 = vadd.f32 %v1004, %v1050
    %v1070 = vadd.f32 %v1005, %v1063
    %v1071 = vadd.f32 %v1006, %v1059
    %v1072 = vadd.f32 %v1007, %v1055
    %v1073 = vadd.f32 %v1008, %v1051
    %v1074 = vadd.f32 %v1009, %v1064
    %v1075 = vadd.f32 %v1010, %v1060
    %v1076 = vadd.f32 %v1011, %v1056
    %v1077 = vadd.f32 %v1012, %v1052
    %v1078 = vadd.f32 %v1013, %v1065
    %v1079 = vadd.f32 %v1014, %v1061
    %v1080 = vadd.f32 %v1015, %v1057
    %v1081 = vadd.f32 %v1016, %v1053
    %v1082 = vsel %vm403, 1, 0
    %v1083 = vsel %vm404, 1, 0
    %v1084 = vsel %vm405, 1, 0
    %v1085 = vsel %vm406, 1, 0
    %vm1086 = vcmp.eq.s32.totalorder %v1082, 1
    %vm1087 = vcmp.eq.s32.totalorder %v1083, 1
    %vm1088 = vcmp.eq.s32.totalorder %v1084, 1
    %vm1089 = vcmp.eq.s32.totalorder %v1085, 1
    %v1090 = vsel %vm1086, %v1066, %v1001
    %v1091 = vsel %vm1087, %v1067, %v1002
    %v1092 = vsel %vm1088, %v1068, %v1003
    %v1093 = vsel %vm1089, %v1069, %v1004
    %v1094 = vsel %vm1086, %v1070, %v1005
    %v1095 = vsel %vm1087, %v1071, %v1006
    %v1096 = vsel %vm1088, %v1072, %v1007
    %v1097 = vsel %vm1089, %v1073, %v1008
    %v1098 = vsel %vm1086, %v1074, %v1009
    %v1099 = vsel %vm1087, %v1075, %v1010
    %v1100 = vsel %vm1088, %v1076, %v1011
    %v1101 = vsel %vm1089, %v1077, %v1012
    %v1102 = vsel %vm1086, %v1078, %v1013
    %v1103 = vsel %vm1087, %v1079, %v1014
    %v1104 = vsel %vm1088, %v1080, %v1015
    %v1105 = vsel %vm1089, %v1081, %v1016
    %v1106 = vadd.f32 %v1090, %v1093
    %v1107 = vadd.f32 %v1091, %v1090
    %v1108 = vadd.f32 %v1092, %v1091
    %v1109 = vadd.f32 %v1093, %v1092
    %v1110 = vadd.f32 %v1094, %v1097
    %v1111 = vadd.f32 %v1095, %v1094
    %v1112 = vadd.f32 %v1096, %v1095
    %v1113 = vadd.f32 %v1097, %v1096
    %v1114 = vadd.f32 %v1098, %v1101
    %v1115 = vadd.f32 %v1099, %v1098
    %v1116 = vadd.f32 %v1100, %v1099
    %v1117 = vadd.f32 %v1101, %v1100
    %v1118 = vadd.f32 %v1102, %v1105
    %v1119 = vadd.f32 %v1103, %v1102
    %v1120 = vadd.f32 %v1104, %v1103
    %v1121 = vadd.f32 %v1105, %v1104
    %v1122 = vsel %vm407, 1, 0
    %v1123 = vsel %vm408, 1, 0
    %v1124 = vsel %vm409, 1, 0
    %v1125 = vsel %vm410, 1, 0
    %vm1126 = vcmp.eq.s32.totalorder %v1122, 1
    %vm1127 = vcmp.eq.s32.totalorder %v1123, 1
    %vm1128 = vcmp.eq.s32.totalorder %v1124, 1
    %vm1129 = vcmp.eq.s32.totalorder %v1125, 1
    %v1130 = vsel %vm1126, %v1106, %v1090
    %v1131 = vsel %vm1127, %v1107, %v1091
    %v1132 = vsel %vm1128, %v1108, %v1092
    %v1133 = vsel %vm1129, %v1109, %v1093
    %v1134 = vsel %vm1126, %v1110, %v1094
    %v1135 = vsel %vm1127, %v1111, %v1095
    %v1136 = vsel %vm1128, %v1112, %v1096
    %v1137 = vsel %vm1129, %v1113, %v1097
    %v1138 = vsel %vm1126, %v1114, %v1098
    %v1139 = vsel %vm1127, %v1115, %v1099
    %v1140 = vsel %vm1128, %v1116, %v1100
    %v1141 = vsel %vm1129, %v1117, %v1101
    %v1142 = vsel %vm1126, %v1118, %v1102
    %v1143 = vsel %vm1127, %v1119, %v1103
    %v1144 = vsel %vm1128, %v1120, %v1104
    %v1145 = vsel %vm1129, %v1121, %v1105
    %v1146 = vadd.f32 %v1130, %v1132
    %v1147 = vadd.f32 %v1131, %v1133
    %v1148 = vadd.f32 %v1134, %v1136
    %v1149 = vadd.f32 %v1135, %v1137
    %v1150 = vadd.f32 %v1138, %v1140
    %v1151 = vadd.f32 %v1139, %v1141
    %v1152 = vadd.f32 %v1142, %v1144
    %v1153 = vadd.f32 %v1143, %v1145
    %v1154 = vsel %vm411, 1, 0
    %v1155 = vsel %vm412, 1, 0
    %v1156 = vsel %vm413, 1, 0
    %v1157 = vsel %vm414, 1, 0
    %vm1158 = vcmp.eq.s32.totalorder %v1154, 1
    %vm1159 = vcmp.eq.s32.totalorder %v1155, 1
    %vm1160 = vcmp.eq.s32.totalorder %v1156, 1
    %vm1161 = vcmp.eq.s32.totalorder %v1157, 1
    %v1162 = vsel %vm1158, %v1146, %v1130
    %v1163 = vsel %vm1159, %v1147, %v1131
    %v1164 = vsel %vm1160, %v1146, %v1132
    %v1165 = vsel %vm1161, %v1147, %v1133
    %v1166 = vsel %vm1158, %v1148, %v1134
    %v1167 = vsel %vm1159, %v1149, %v1135
    %v1168 = vsel %vm1160, %v1148, %v1136
    %v1169 = vsel %vm1161, %v1149, %v1137
    %v1170 = vsel %vm1158, %v1150, %v1138
    %v1171 = vsel %vm1159, %v1151, %v1139
    %v1172 = vsel %vm1160, %v1150, %v1140
    %v1173 = vsel %vm1161, %v1151, %v1141
    %v1174 = vsel %vm1158, %v1152, %v1142
    %v1175 = vsel %vm1159, %v1153, %v1143
    %v1176 = vsel %vm1160, %v1152, %v1144
    %v1177 = vsel %vm1161, %v1153, %v1145
    %v1178 = vrcp.pop %v1165
    %v1179 = vrcp.pop %v1169
    %v1180 = vrcp.pop %v1173
    %v1181 = vrcp.pop %v1177
    %v1182 = vmul.f32 %v1165, %v1178
    %v1183 = vmul.f32 %v1169, %v1179
    %v1184 = vmul.f32 %v1173, %v1180
    %v1185 = vmul.f32 %v1177, %v1181
    %v1186 = vsub.f32 2.0, %v1182
    %v1187 = vsub.f32 2.0, %v1183
    %v1188 = vsub.f32 2.0, %v1184
    %v1189 = vsub.f32 2.0, %v1185
    %v1190 = vmul.f32 %v1178, %v1186
    %v1191 = vmul.f32 %v1179, %v1187
    %v1192 = vmul.f32 %v1180, %v1188
    %v1193 = vmul.f32 %v1181, %v1189
    %1195 = vset.pattern.permute.xlu0 127
    %1196 = vperm.xlu0 %1195, %v1190
    %v1197 = vpop.permute.xlu0 %1196
    %1200 = vset.pattern.permute.xlu0 127
    %1201 = vperm.xlu0 %1200, %v1191
    %v1202 = vpop.permute.xlu0 %1201
    %1205 = vset.pattern.permute.xlu0 127
    %1206 = vperm.xlu0 %1205, %v1192
    %v1207 = vpop.permute.xlu0 %1206
    %1210 = vset.pattern.permute.xlu0 127
    %1211 = vperm.xlu0 %1210, %v1193
    %v1212 = vpop.permute.xlu0 %1211
    %v1214 = vmul.f32 %v1162, %v1197
    %v1215 = vmul.f32 %v1163, %v1197
    %v1216 = vmul.f32 %v1164, %v1197
    %v1217 = vmul.f32 %v1165, %v1197
    %v1218 = vmul.f32 %v1166, %v1202
    %v1219 = vmul.f32 %v1167, %v1202
    %v1220 = vmul.f32 %v1168, %v1202
    %v1221 = vmul.f32 %v1169, %v1202
    %v1222 = vmul.f32 %v1170, %v1207
    %v1223 = vmul.f32 %v1171, %v1207
    %v1224 = vmul.f32 %v1172, %v1207
    %v1225 = vmul.f32 %v1173, %v1207
    %v1226 = vmul.f32 %v1174, %v1212
    %v1227 = vmul.f32 %v1175, %v1212
    %v1228 = vmul.f32 %v1176, %v1212
    %v1229 = vmul.f32 %v1177, %v1212
    %1230 = vst [vmem:[#allocation7] sm:$0xff] %v1214
    %1231 = vst [vmem:[#allocation7 + $0x8] sm:$0xff] %v1215
    %1232 = vst [vmem:[#allocation7 + $0x10] sm:$0xff] %v1216
    %1233 = vst [vmem:[#allocation7 + $0x18] sm:$0xff] %v1217
    %1234 = vst [vmem:[#allocation7 + $0x20] sm:$0xff] %v1218
    %1235 = vst [vmem:[#allocation7 + $0x28] sm:$0xff] %v1219
    %1236 = vst [vmem:[#allocation7 + $0x30] sm:$0xff] %v1220
    %1237 = vst [vmem:[#allocation7 + $0x38] sm:$0xff] %v1221
    %1238 = vst [vmem:[#allocation7 + $0x40] sm:$0xff] %v1222
    %1239 = vst [vmem:[#allocation7 + $0x48] sm:$0xff] %v1223
    %1240 = vst [vmem:[#allocation7 + $0x50] sm:$0xff] %v1224
    %1241 = vst [vmem:[#allocation7 + $0x58] sm:$0xff] %v1225
    %1242 = vst [vmem:[#allocation7 + $0x60] sm:$0xff] %v1226
    %1243 = vst [vmem:[#allocation7 + $0x68] sm:$0xff] %v1227
    %1244 = vst [vmem:[#allocation7 + $0x70] sm:$0xff] %v1228
    %1245 = vst [vmem:[#allocation7 + $0x78] sm:$0xff] %v1229
    // Predicated region
    $region38: #{tpu_custom_call.1} parent=1 // pred_check
      _
    $region39: #{tpu_custom_call.1} parent=1 // pred_check_branch
      %1247 = sbr.rel (0) target = $region41
    $region40: #{tpu_custom_call.1} parent=1 // pred_region
      %1249 = vsyncadd [#allocation4], 0
      %s1250 = sshll.u32 [#allocation7], 4
      %s1251 = int_to_ptr.vmem [resolvable:$true] %s1250
      %s1252 = sshll.u32 %s7, 4
      %s1253 = int_to_ptr.hbm [resolvable:$true] %s1252
      %1258 = dma.vmem_to_hbm [thread:$0]  %s1251, 2048, %s1253, [#allocation4], 512, 512, 32
    $region41: #{tpu_custom_call.1} parent=1 // pred_fallthru
      _
    // Predicated region
    $region42: #{tpu_custom_call.1} parent=1 // pred_check
      _
    $region43: #{tpu_custom_call.1} parent=1 // pred_check_branch
      %1260 = sbr.rel (0) target = $region45
    $region44: #{tpu_custom_call.1} parent=1 // pred_region
      %1262 = dma.done [#allocation4], 2048
    $region45: #{tpu_custom_call.1} parent=1 // pred_fallthru
      _
    %1263 = vsyncpa [#allocation3], 1
    %1264 = vsyncpa [#allocation6], 1
    %1265 = vsyncpa [#allocation4], 1

</llo_original>
